<compile_context>
chip_gen: v5e
topology: v5e:2x2
jax: 0.10.0
libtpu: 0.0.40
codegen_flags: <defaults>
</compile_context>

<pallas_src>
import functools

import numpy as np
import jax
import jax.numpy as jnp
from jax.experimental import pallas as pl
from jax.experimental.pallas import tpu as pltpu


def _round_up(x: int, m: int) -> int:
    return (x + m - 1) // m * m


@functools.lru_cache(maxsize=None)
def _slab_pool_matrix(patch_size: int, num_patches: int, fpad: int) -> np.ndarray:
    """(ps*W, fpad) matrix averaging one ps-row slab into its np column patches.

    P[t, j] = 1/ps^2 iff slab pixel t = r*W + w lies in column-patch j (= w // ps).
    The same matrix is reused for every row-patch slab (kept resident in VMEM).
    """
    ps = patch_size
    W = ps * num_patches
    slab = ps * W
    col = (np.arange(slab) % W) // ps
    P = np.zeros((slab, fpad), dtype=np.float32)
    P[np.arange(slab), col] = 1.0 / float(ps * ps)
    return P


def _kernel(x_ref, p_ref, w_ref, b_ref, o_ref, *, slabs_per_step, slab):
    """One grid step: pool `slabs_per_step` row-patch slabs and apply their FC slices."""
    i = pl.program_id(1)  # slab-group index (reduction axis)

    @pl.when(i == 0)
    def _():
        # Output block is resident across the reduction axis: init it with the bias.
        o_ref[...] = jnp.zeros_like(o_ref) + b_ref[...]

    pool = p_ref[...]
    # Small static unroll over the slabs in this group (typically 1-4; up to np for
    # tiny images).  Slices start at multiples of `slab` (a multiple of 128) -> free.
    for s in range(slabs_per_step):
        # Cast the streamed f32 slab to bf16 on the VPU (hidden under the slab DMA).
        xs = x_ref[:, s * slab:(s + 1) * slab].astype(jnp.bfloat16)
        # Pool: (tile_b, ps*W) @ (ps*W, fpad) -> column-patch means (f32).
        # NOTE (v5e): could pre-sum the ps sub-rows with VPU adds to shrink this
        # matmul 16x if the MXU ever becomes the bottleneck there.
        m = jnp.dot(xs, pool, preferred_element_type=jnp.float32)
        # Fused FC partial for row-patch i*k+s: (tile_b, fpad) @ (fpad, cpad).
        o_ref[...] += jnp.dot(m.astype(jnp.bfloat16),
                              w_ref[i * slabs_per_step + s],
                              preferred_element_type=jnp.float32)


@functools.partial(jax.jit, static_argnames=("patch_size", "num_patches", "tile_b"))
def patch_linear_predictor(x, fc_weight, fc_bias, *, patch_size, num_patches, tile_b=256):
    """
    x:         (B, 1, H, W)  float32, H = W = num_patches * patch_size
    fc_weight: (num_classes, num_patches*num_patches)
    fc_bias:   (num_classes,)
    returns:   (B, num_classes) float32 logits
    """
    B = x.shape[0]
    ps, npch = patch_size, num_patches
    H = W = npch * ps
    num_classes = fc_weight.shape[0]
    assert x.shape == (B, 1, H, W), f"expected {(B, 1, H, W)}, got {x.shape}"
    assert fc_weight.shape == (num_classes, npch * npch)

    slab = ps * W  # pixels per row-patch slab
    # Lane alignment of the streamed x block (ImageNet default: 16*224 = 3584 = 28*128).
    # TODO(synk): support slab widths that are not multiples of 128 (needs padded W).
    assert slab % 128 == 0, (
        f"patch_size*patch_size*num_patches must be a multiple of 128, got {slab}")

    fpad = _round_up(max(npch, 128), 128)   # padded column-patch feature dim
    cpad = _round_up(num_classes, 128)      # lane-dense class dim

    # --- Batch tile selection (f32 streaming -> sublane multiple of 8). -------------
    tile_b = max(8, _round_up(min(int(tile_b), B), 8))
    if B >= 16:
        # Keep >= 2 tiles on the "parallel" batch axis so both v7x TensorCores get
        # work; costs only a handful of extra (cheap) grid steps on v5e/v6e.
        tile_b = min(tile_b, _round_up((B + 1) // 2, 8))
    b_pad = _round_up(B, tile_b)

    # --- Slab grouping: pull k row-patch slabs into one grid step (amortizes the ----
    # ~0.35 us/step overhead and lengthens DMA bursts) under an ~8 MiB x-block budget.
    x_block_budget = 8 * 1024 * 1024
    slabs_per_step = 1
    for cand in range(1, npch + 1):
        if npch % cand == 0 and tile_b * cand * slab * 4 <= x_block_budget:
            slabs_per_step = cand
    k = slabs_per_step

    # Flatten NCHW (C=1) row-major (free reshape); stream as f32 (no bf16 copy pass).
    xf = x.reshape(B, H * W).astype(jnp.float32)
    if b_pad != B:
        xf = jnp.pad(xf, ((0, b_pad - B), (0, 0)))

    # Resident operands (constant index_maps + single-buffered -> DMA'd once).
    pmat = jnp.asarray(_slab_pool_matrix(ps, npch, fpad), dtype=jnp.bfloat16)
    w3 = fc_weight.T.astype(jnp.bfloat16).reshape(npch, npch, num_classes)   # [i, j, c]
    w3 = jnp.zeros((npch, fpad, cpad), jnp.bfloat16).at[:, :npch, :num_classes].set(w3)
    b2 = jnp.zeros((1, cpad), jnp.float32).at[0, :num_classes].set(fc_bias.astype(jnp.float32))

    # Explicit VMEM budget (x + out double-buffered, residents single-buffered).
    est_vmem = (2 * tile_b * k * slab * 4            # streamed image block
                + 2 * tile_b * cpad * 4              # resident output block
                + slab * fpad * 2                    # pool matrix
                + npch * fpad * cpad * 2             # FC weight
                + 8 * cpad * 4)                      # bias (padded)
    vmem_limit = int(min(100 * 1024 * 1024, max(32 * 1024 * 1024, est_vmem * 2)))

    grid = (b_pad // tile_b, npch // k)
    kernel = functools.partial(_kernel, slabs_per_step=k, slab=slab)

    out = pl.pallas_call(
        kernel,
        out_shape=jax.ShapeDtypeStruct((b_pad, cpad), jnp.float32),
        grid_spec=pltpu.PrefetchScalarGridSpec(
            num_scalar_prefetch=0,
            grid=grid,
            in_specs=[
                # Streamed image block: k row-patch slabs per step (f32).
                pl.BlockSpec((tile_b, k * slab), lambda b, i: (b, i)),
                # Resident operands: constant index_map, single-buffered.
                pl.BlockSpec((slab, fpad), lambda b, i: (0, 0),
                             pipeline_mode=pl.Buffered(1)),
                pl.BlockSpec((npch, fpad, cpad), lambda b, i: (0, 0, 0),
                             pipeline_mode=pl.Buffered(1)),
                pl.BlockSpec((1, cpad), lambda b, i: (0, 0),
                             pipeline_mode=pl.Buffered(1)),
            ],
            out_specs=pl.BlockSpec((tile_b, cpad), lambda b, i: (b, 0)),
        ),
        compiler_params=pltpu.CompilerParams(
            dimension_semantics=("parallel", "arbitrary"),
            vmem_limit_bytes=vmem_limit),
    )(xf, pmat, w3, b2)

    return out[:B, :num_classes]


def _reference(x, fc_weight, fc_bias, *, patch_size, num_patches):
    """Pure-JAX f32 reference matching the PyTorch module."""
    B = x.shape[0]
    ps, npch = patch_size, num_patches
    xr = x.reshape(B, 1, npch, ps, npch, ps)
    feats = xr.mean(axis=(3, 5)).reshape(B, npch * npch)   # flatten as i*np + j
    return feats @ fc_weight.T + fc_bias


def _run_case(key, batch, patch_size, num_patches, num_classes):
    H = W = patch_size * num_patches
    kx, kw, kb = jax.random.split(key, 3)
    x = jax.random.normal(kx, (batch, 1, H, W), dtype=jnp.float32)
    fan_in = num_patches * num_patches
    bound = 1.0 / np.sqrt(fan_in)
    fc_weight = jax.random.uniform(kw, (num_classes, fan_in), jnp.float32, -bound, bound)
    fc_bias = jax.random.uniform(kb, (num_classes,), jnp.float32, -bound, bound)

    out = patch_linear_predictor(
        x, fc_weight, fc_bias, patch_size=patch_size, num_patches=num_patches)
    out = jax.block_until_ready(out)

    ref = _reference(x, fc_weight, fc_bias, patch_size=patch_size, num_patches=num_patches)
    # bf16 pool/weight operands -> relaxed tolerance (values are O(1), accumulation f32).
    np.testing.assert_allclose(np.asarray(out), np.asarray(ref), rtol=1e-2, atol=1e-2)


if __name__ == "__main__":
    key = jax.random.PRNGKey(0)
    k1, k2 = jax.random.split(key)

    # Small, shape-consistent configuration (H = W = 32; ps*ps*np = 128 lane-aligned).
    _run_case(k1, batch=2, patch_size=4, num_patches=8, num_classes=32)
    # Exercise batch tiling + tail padding + non-128-multiple class count.
    _run_case(k2, batch=20, patch_size=4, num_patches=8, num_classes=40)

    print("KERNEL_OK")
</pallas_src>

<mosaic_0001>
module attributes {stable_mosaic.version = 11 : i64} {
  func.func @_kernel(%arg0: i32, %arg1: i32, %arg2: memref<8x1024xf32, #tpu.memory_space<vmem>>, %arg3: memref<128x128xbf16, #tpu.memory_space<vmem>>, %arg4: memref<8x128x128xbf16, #tpu.memory_space<vmem>>, %arg5: memref<1x128xf32, #tpu.memory_space<vmem>>, %arg6: memref<8x128xf32, #tpu.memory_space<vmem>>) attributes {dimension_semantics = [#tpu.dimension_semantics<parallel>, #tpu.dimension_semantics<arbitrary>], iteration_bounds = array<i64: 1, 1>, scalar_prefetch = 0 : i64, scratch_operands = 0 : i64, tpu.core_type = #tpu.core_type<tc>, window_params = [{transform_indices = @transform_0, window_bounds = array<i64: 8, 1024>}, {pipeline_mode = #tpu.pipeline_mode<synchronous>, transform_indices = @transform_1, window_bounds = array<i64: 128, 128>}, {pipeline_mode = #tpu.pipeline_mode<synchronous>, transform_indices = @transform_2, window_bounds = array<i64: 8, 128, 128>}, {pipeline_mode = #tpu.pipeline_mode<synchronous>, transform_indices = @transform_3, window_bounds = array<i64: 1, 128>}, {transform_indices = @transform_4, window_bounds = array<i64: 8, 128>}]} {
    %c0_i32 = arith.constant 0 : i32
    %0 = arith.cmpi eq, %arg1, %c0_i32 : i32
    %1 = arith.extui %0 : i1 to i32
    %c0_i32_0 = arith.constant 0 : i32
    %2 = arith.cmpi ne, %1, %c0_i32_0 : i32
    scf.if %2 {
      %cst_82 = arith.constant 0.000000e+00 : f32
      %108 = vector.broadcast %cst_82 : f32 to vector<8x128xf32>
      %c0_83 = arith.constant 0 : index
      %c0_84 = arith.constant 0 : index
      %109 = vector.load %arg5[%c0_83, %c0_84] : memref<1x128xf32, #tpu.memory_space<vmem>>, vector<1x128xf32>
      %110 = vector.broadcast %109 : vector<1x128xf32> to vector<8x128xf32>
      %111 = arith.addf %108, %110 : vector<8x128xf32>
      %c0_85 = arith.constant 0 : index
      %c0_86 = arith.constant 0 : index
      %112 = vector.load %arg6[%c0_85, %c0_86] : memref<8x128xf32, #tpu.memory_space<vmem>>, vector<8x128xf32>
      tpu.vector_store %arg6[%c0_85, %c0_86], %111 {strides = array<i32>} : memref<8x128xf32, #tpu.memory_space<vmem>>, vector<8x128xf32>,
    } else {
    }
    %c0 = arith.constant 0 : index
    %c0_1 = arith.constant 0 : index
    %3 = vector.load %arg3[%c0, %c0_1] : memref<128x128xbf16, #tpu.memory_space<vmem>>, vector<128x128xbf16>
    %c0_2 = arith.constant 0 : index
    %c0_3 = arith.constant 0 : index
    %4 = vector.load %arg2[%c0_2, %c0_3] : memref<8x1024xf32, #tpu.memory_space<vmem>>, vector<8x128xf32>
    %5 = arith.truncf %4 : vector<8x128xf32> to vector<8x128xbf16>
    %cst = arith.constant dense<0.000000e+00> : vector<8x128xf32>
    %6 = tpu.matmul %5, %3, %cst {dimension_numbers = #tpu.dot_dimension_numbers<[1], [0], [0], [1], [0, 0, 1, 1], [], []>} : vector<8x128xbf16>, vector<128x128xbf16>, vector<8x128xf32> -> vector<8x128xf32>
    %c0_4 = arith.constant 0 : index
    %c0_5 = arith.constant 0 : index
    %7 = vector.load %arg6[%c0_4, %c0_5] : memref<8x128xf32, #tpu.memory_space<vmem>>, vector<8x128xf32>
    %8 = arith.truncf %6 : vector<8x128xf32> to vector<8x128xbf16>
    %c8_i32 = arith.constant 8 : i32
    %9 = arith.muli %arg1, %c8_i32 : i32
    %c0_i32_6 = arith.constant 0 : i32
    %10 = arith.addi %9, %c0_i32_6 : i32
    %11 = arith.index_cast %10 : i32 to index
    %c0_7 = arith.constant 0 : index
    %c0_8 = arith.constant 0 : index
    %12 = vector.load %arg4[%11, %c0_7, %c0_8] : memref<8x128x128xbf16, #tpu.memory_space<vmem>>, vector<1x128x128xbf16>
    %13 = vector.shape_cast %12 : vector<1x128x128xbf16> to vector<128x128xbf16>
    %cst_9 = arith.constant dense<0.000000e+00> : vector<8x128xf32>
    %14 = tpu.matmul %8, %13, %cst_9 {dimension_numbers = #tpu.dot_dimension_numbers<[1], [0], [0], [1], [0, 0, 1, 1], [], []>} : vector<8x128xbf16>, vector<128x128xbf16>, vector<8x128xf32> -> vector<8x128xf32>
    %15 = arith.addf %7, %14 : vector<8x128xf32>
    %c0_10 = arith.constant 0 : index
    %c0_11 = arith.constant 0 : index
    %16 = vector.load %arg6[%c0_10, %c0_11] : memref<8x128xf32, #tpu.memory_space<vmem>>, vector<8x128xf32>
    tpu.vector_store %arg6[%c0_10, %c0_11], %15 {strides = array<i32>} : memref<8x128xf32, #tpu.memory_space<vmem>>, vector<8x128xf32>,
    %c0_12 = arith.constant 0 : index
    %c128 = arith.constant 128 : index
    %17 = vector.load %arg2[%c0_12, %c128] : memref<8x1024xf32, #tpu.memory_space<vmem>>, vector<8x128xf32>
    %18 = arith.truncf %17 : vector<8x128xf32> to vector<8x128xbf16>
    %cst_13 = arith.constant dense<0.000000e+00> : vector<8x128xf32>
    %19 = tpu.matmul %18, %3, %cst_13 {dimension_numbers = #tpu.dot_dimension_numbers<[1], [0], [0], [1], [0, 0, 1, 1], [], []>} : vector<8x128xbf16>, vector<128x128xbf16>, vector<8x128xf32> -> vector<8x128xf32>
    %c0_14 = arith.constant 0 : index
    %c0_15 = arith.constant 0 : index
    %20 = vector.load %arg6[%c0_14, %c0_15] : memref<8x128xf32, #tpu.memory_space<vmem>>, vector<8x128xf32>
    %21 = arith.truncf %19 : vector<8x128xf32> to vector<8x128xbf16>
    %c8_i32_16 = arith.constant 8 : i32
    %22 = arith.muli %arg1, %c8_i32_16 : i32
    %c1_i32 = arith.constant 1 : i32
    %23 = arith.addi %22, %c1_i32 : i32
    %24 = arith.index_cast %23 : i32 to index
    %c0_17 = arith.constant 0 : index
    %c0_18 = arith.constant 0 : index
    %25 = vector.load %arg4[%24, %c0_17, %c0_18] : memref<8x128x128xbf16, #tpu.memory_space<vmem>>, vector<1x128x128xbf16>
    %26 = vector.shape_cast %25 : vector<1x128x128xbf16> to vector<128x128xbf16>
    %cst_19 = arith.constant dense<0.000000e+00> : vector<8x128xf32>
    %27 = tpu.matmul %21, %26, %cst_19 {dimension_numbers = #tpu.dot_dimension_numbers<[1], [0], [0], [1], [0, 0, 1, 1], [], []>} : vector<8x128xbf16>, vector<128x128xbf16>, vector<8x128xf32> -> vector<8x128xf32>
    %28 = arith.addf %20, %27 : vector<8x128xf32>
    %c0_20 = arith.constant 0 : index
    %c0_21 = arith.constant 0 : index
    %29 = vector.load %arg6[%c0_20, %c0_21] : memref<8x128xf32, #tpu.memory_space<vmem>>, vector<8x128xf32>
    tpu.vector_store %arg6[%c0_20, %c0_21], %28 {strides = array<i32>} : memref<8x128xf32, #tpu.memory_space<vmem>>, vector<8x128xf32>,
    %c0_22 = arith.constant 0 : index
    %c256 = arith.constant 256 : index
    %30 = vector.load %arg2[%c0_22, %c256] : memref<8x1024xf32, #tpu.memory_space<vmem>>, vector<8x128xf32>
    %31 = arith.truncf %30 : vector<8x128xf32> to vector<8x128xbf16>
    %cst_23 = arith.constant dense<0.000000e+00> : vector<8x128xf32>
    %32 = tpu.matmul %31, %3, %cst_23 {dimension_numbers = #tpu.dot_dimension_numbers<[1], [0], [0], [1], [0, 0, 1, 1], [], []>} : vector<8x128xbf16>, vector<128x128xbf16>, vector<8x128xf32> -> vector<8x128xf32>
    %c0_24 = arith.constant 0 : index
    %c0_25 = arith.constant 0 : index
    %33 = vector.load %arg6[%c0_24, %c0_25] : memref<8x128xf32, #tpu.memory_space<vmem>>, vector<8x128xf32>
    %34 = arith.truncf %32 : vector<8x128xf32> to vector<8x128xbf16>
    %c8_i32_26 = arith.constant 8 : i32
    %35 = arith.muli %arg1, %c8_i32_26 : i32
    %c2_i32 = arith.constant 2 : i32
    %36 = arith.addi %35, %c2_i32 : i32
    %37 = arith.index_cast %36 : i32 to index
    %c0_27 = arith.constant 0 : index
    %c0_28 = arith.constant 0 : index
    %38 = vector.load %arg4[%37, %c0_27, %c0_28] : memref<8x128x128xbf16, #tpu.memory_space<vmem>>, vector<1x128x128xbf16>
    %39 = vector.shape_cast %38 : vector<1x128x128xbf16> to vector<128x128xbf16>
    %cst_29 = arith.constant dense<0.000000e+00> : vector<8x128xf32>
    %40 = tpu.matmul %34, %39, %cst_29 {dimension_numbers = #tpu.dot_dimension_numbers<[1], [0], [0], [1], [0, 0, 1, 1], [], []>} : vector<8x128xbf16>, vector<128x128xbf16>, vector<8x128xf32> -> vector<8x128xf32>
    %41 = arith.addf %33, %40 : vector<8x128xf32>
    %c0_30 = arith.constant 0 : index
    %c0_31 = arith.constant 0 : index
    %42 = vector.load %arg6[%c0_30, %c0_31] : memref<8x128xf32, #tpu.memory_space<vmem>>, vector<8x128xf32>
    tpu.vector_store %arg6[%c0_30, %c0_31], %41 {strides = array<i32>} : memref<8x128xf32, #tpu.memory_space<vmem>>, vector<8x128xf32>,
    %c0_32 = arith.constant 0 : index
    %c384 = arith.constant 384 : index
    %43 = vector.load %arg2[%c0_32, %c384] : memref<8x1024xf32, #tpu.memory_space<vmem>>, vector<8x128xf32>
    %44 = arith.truncf %43 : vector<8x128xf32> to vector<8x128xbf16>
    %cst_33 = arith.constant dense<0.000000e+00> : vector<8x128xf32>
    %45 = tpu.matmul %44, %3, %cst_33 {dimension_numbers = #tpu.dot_dimension_numbers<[1], [0], [0], [1], [0, 0, 1, 1], [], []>} : vector<8x128xbf16>, vector<128x128xbf16>, vector<8x128xf32> -> vector<8x128xf32>
    %c0_34 = arith.constant 0 : index
    %c0_35 = arith.constant 0 : index
    %46 = vector.load %arg6[%c0_34, %c0_35] : memref<8x128xf32, #tpu.memory_space<vmem>>, vector<8x128xf32>
    %47 = arith.truncf %45 : vector<8x128xf32> to vector<8x128xbf16>
    %c8_i32_36 = arith.constant 8 : i32
    %48 = arith.muli %arg1, %c8_i32_36 : i32
    %c3_i32 = arith.constant 3 : i32
    %49 = arith.addi %48, %c3_i32 : i32
    %50 = arith.index_cast %49 : i32 to index
    %c0_37 = arith.constant 0 : index
    %c0_38 = arith.constant 0 : index
    %51 = vector.load %arg4[%50, %c0_37, %c0_38] : memref<8x128x128xbf16, #tpu.memory_space<vmem>>, vector<1x128x128xbf16>
    %52 = vector.shape_cast %51 : vector<1x128x128xbf16> to vector<128x128xbf16>
    %cst_39 = arith.constant dense<0.000000e+00> : vector<8x128xf32>
    %53 = tpu.matmul %47, %52, %cst_39 {dimension_numbers = #tpu.dot_dimension_numbers<[1], [0], [0], [1], [0, 0, 1, 1], [], []>} : vector<8x128xbf16>, vector<128x128xbf16>, vector<8x128xf32> -> vector<8x128xf32>
    %54 = arith.addf %46, %53 : vector<8x128xf32>
    %c0_40 = arith.constant 0 : index
    %c0_41 = arith.constant 0 : index
    %55 = vector.load %arg6[%c0_40, %c0_41] : memref<8x128xf32, #tpu.memory_space<vmem>>, vector<8x128xf32>
    tpu.vector_store %arg6[%c0_40, %c0_41], %54 {strides = array<i32>} : memref<8x128xf32, #tpu.memory_space<vmem>>, vector<8x128xf32>,
    %c0_42 = arith.constant 0 : index
    %c512 = arith.constant 512 : index
    %56 = vector.load %arg2[%c0_42, %c512] : memref<8x1024xf32, #tpu.memory_space<vmem>>, vector<8x128xf32>
    %57 = arith.truncf %56 : vector<8x128xf32> to vector<8x128xbf16>
    %cst_43 = arith.constant dense<0.000000e+00> : vector<8x128xf32>
    %58 = tpu.matmul %57, %3, %cst_43 {dimension_numbers = #tpu.dot_dimension_numbers<[1], [0], [0], [1], [0, 0, 1, 1], [], []>} : vector<8x128xbf16>, vector<128x128xbf16>, vector<8x128xf32> -> vector<8x128xf32>
    %c0_44 = arith.constant 0 : index
    %c0_45 = arith.constant 0 : index
    %59 = vector.load %arg6[%c0_44, %c0_45] : memref<8x128xf32, #tpu.memory_space<vmem>>, vector<8x128xf32>
    %60 = arith.truncf %58 : vector<8x128xf32> to vector<8x128xbf16>
    %c8_i32_46 = arith.constant 8 : i32
    %61 = arith.muli %arg1, %c8_i32_46 : i32
    %c4_i32 = arith.constant 4 : i32
    %62 = arith.addi %61, %c4_i32 : i32
    %63 = arith.index_cast %62 : i32 to index
    %c0_47 = arith.constant 0 : index
    %c0_48 = arith.constant 0 : index
    %64 = vector.load %arg4[%63, %c0_47, %c0_48] : memref<8x128x128xbf16, #tpu.memory_space<vmem>>, vector<1x128x128xbf16>
    %65 = vector.shape_cast %64 : vector<1x128x128xbf16> to vector<128x128xbf16>
    %cst_49 = arith.constant dense<0.000000e+00> : vector<8x128xf32>
    %66 = tpu.matmul %60, %65, %cst_49 {dimension_numbers = #tpu.dot_dimension_numbers<[1], [0], [0], [1], [0, 0, 1, 1], [], []>} : vector<8x128xbf16>, vector<128x128xbf16>, vector<8x128xf32> -> vector<8x128xf32>
    %67 = arith.addf %59, %66 : vector<8x128xf32>
    %c0_50 = arith.constant 0 : index
    %c0_51 = arith.constant 0 : index
    %68 = vector.load %arg6[%c0_50, %c0_51] : memref<8x128xf32, #tpu.memory_space<vmem>>, vector<8x128xf32>
    tpu.vector_store %arg6[%c0_50, %c0_51], %67 {strides = array<i32>} : memref<8x128xf32, #tpu.memory_space<vmem>>, vector<8x128xf32>,
    %c0_52 = arith.constant 0 : index
    %c640 = arith.constant 640 : index
    %69 = vector.load %arg2[%c0_52, %c640] : memref<8x1024xf32, #tpu.memory_space<vmem>>, vector<8x128xf32>
    %70 = arith.truncf %69 : vector<8x128xf32> to vector<8x128xbf16>
    %cst_53 = arith.constant dense<0.000000e+00> : vector<8x128xf32>
    %71 = tpu.matmul %70, %3, %cst_53 {dimension_numbers = #tpu.dot_dimension_numbers<[1], [0], [0], [1], [0, 0, 1, 1], [], []>} : vector<8x128xbf16>, vector<128x128xbf16>, vector<8x128xf32> -> vector<8x128xf32>
    %c0_54 = arith.constant 0 : index
    %c0_55 = arith.constant 0 : index
    %72 = vector.load %arg6[%c0_54, %c0_55] : memref<8x128xf32, #tpu.memory_space<vmem>>, vector<8x128xf32>
    %73 = arith.truncf %71 : vector<8x128xf32> to vector<8x128xbf16>
    %c8_i32_56 = arith.constant 8 : i32
    %74 = arith.muli %arg1, %c8_i32_56 : i32
    %c5_i32 = arith.constant 5 : i32
    %75 = arith.addi %74, %c5_i32 : i32
    %76 = arith.index_cast %75 : i32 to index
    %c0_57 = arith.constant 0 : index
    %c0_58 = arith.constant 0 : index
    %77 = vector.load %arg4[%76, %c0_57, %c0_58] : memref<8x128x128xbf16, #tpu.memory_space<vmem>>, vector<1x128x128xbf16>
    %78 = vector.shape_cast %77 : vector<1x128x128xbf16> to vector<128x128xbf16>
    %cst_59 = arith.constant dense<0.000000e+00> : vector<8x128xf32>
    %79 = tpu.matmul %73, %78, %cst_59 {dimension_numbers = #tpu.dot_dimension_numbers<[1], [0], [0], [1], [0, 0, 1, 1], [], []>} : vector<8x128xbf16>, vector<128x128xbf16>, vector<8x128xf32> -> vector<8x128xf32>
    %80 = arith.addf %72, %79 : vector<8x128xf32>
    %c0_60 = arith.constant 0 : index
    %c0_61 = arith.constant 0 : index
    %81 = vector.load %arg6[%c0_60, %c0_61] : memref<8x128xf32, #tpu.memory_space<vmem>>, vector<8x128xf32>
    tpu.vector_store %arg6[%c0_60, %c0_61], %80 {strides = array<i32>} : memref<8x128xf32, #tpu.memory_space<vmem>>, vector<8x128xf32>,
    %c0_62 = arith.constant 0 : index
    %c768 = arith.constant 768 : index
    %82 = vector.load %arg2[%c0_62, %c768] : memref<8x1024xf32, #tpu.memory_space<vmem>>, vector<8x128xf32>
    %83 = arith.truncf %82 : vector<8x128xf32> to vector<8x128xbf16>
    %cst_63 = arith.constant dense<0.000000e+00> : vector<8x128xf32>
    %84 = tpu.matmul %83, %3, %cst_63 {dimension_numbers = #tpu.dot_dimension_numbers<[1], [0], [0], [1], [0, 0, 1, 1], [], []>} : vector<8x128xbf16>, vector<128x128xbf16>, vector<8x128xf32> -> vector<8x128xf32>
    %c0_64 = arith.constant 0 : index
    %c0_65 = arith.constant 0 : index
    %85 = vector.load %arg6[%c0_64, %c0_65] : memref<8x128xf32, #tpu.memory_space<vmem>>, vector<8x128xf32>
    %86 = arith.truncf %84 : vector<8x128xf32> to vector<8x128xbf16>
    %c8_i32_66 = arith.constant 8 : i32
    %87 = arith.muli %arg1, %c8_i32_66 : i32
    %c6_i32 = arith.constant 6 : i32
    %88 = arith.addi %87, %c6_i32 : i32
    %89 = arith.index_cast %88 : i32 to index
    %c0_67 = arith.constant 0 : index
    %c0_68 = arith.constant 0 : index
    %90 = vector.load %arg4[%89, %c0_67, %c0_68] : memref<8x128x128xbf16, #tpu.memory_space<vmem>>, vector<1x128x128xbf16>
    %91 = vector.shape_cast %90 : vector<1x128x128xbf16> to vector<128x128xbf16>
    %cst_69 = arith.constant dense<0.000000e+00> : vector<8x128xf32>
    %92 = tpu.matmul %86, %91, %cst_69 {dimension_numbers = #tpu.dot_dimension_numbers<[1], [0], [0], [1], [0, 0, 1, 1], [], []>} : vector<8x128xbf16>, vector<128x128xbf16>, vector<8x128xf32> -> vector<8x128xf32>
    %93 = arith.addf %85, %92 : vector<8x128xf32>
    %c0_70 = arith.constant 0 : index
    %c0_71 = arith.constant 0 : index
    %94 = vector.load %arg6[%c0_70, %c0_71] : memref<8x128xf32, #tpu.memory_space<vmem>>, vector<8x128xf32>
    tpu.vector_store %arg6[%c0_70, %c0_71], %93 {strides = array<i32>} : memref<8x128xf32, #tpu.memory_space<vmem>>, vector<8x128xf32>,
    %c0_72 = arith.constant 0 : index
    %c896 = arith.constant 896 : index
    %95 = vector.load %arg2[%c0_72, %c896] : memref<8x1024xf32, #tpu.memory_space<vmem>>, vector<8x128xf32>
    %96 = arith.truncf %95 : vector<8x128xf32> to vector<8x128xbf16>
    %cst_73 = arith.constant dense<0.000000e+00> : vector<8x128xf32>
    %97 = tpu.matmul %96, %3, %cst_73 {dimension_numbers = #tpu.dot_dimension_numbers<[1], [0], [0], [1], [0, 0, 1, 1], [], []>} : vector<8x128xbf16>, vector<128x128xbf16>, vector<8x128xf32> -> vector<8x128xf32>
    %c0_74 = arith.constant 0 : index
    %c0_75 = arith.constant 0 : index
    %98 = vector.load %arg6[%c0_74, %c0_75] : memref<8x128xf32, #tpu.memory_space<vmem>>, vector<8x128xf32>
    %99 = arith.truncf %97 : vector<8x128xf32> to vector<8x128xbf16>
    %c8_i32_76 = arith.constant 8 : i32
    %100 = arith.muli %arg1, %c8_i32_76 : i32
    %c7_i32 = arith.constant 7 : i32
    %101 = arith.addi %100, %c7_i32 : i32
    %102 = arith.index_cast %101 : i32 to index
    %c0_77 = arith.constant 0 : index
    %c0_78 = arith.constant 0 : index
    %103 = vector.load %arg4[%102, %c0_77, %c0_78] : memref<8x128x128xbf16, #tpu.memory_space<vmem>>, vector<1x128x128xbf16>
    %104 = vector.shape_cast %103 : vector<1x128x128xbf16> to vector<128x128xbf16>
    %cst_79 = arith.constant dense<0.000000e+00> : vector<8x128xf32>
    %105 = tpu.matmul %99, %104, %cst_79 {dimension_numbers = #tpu.dot_dimension_numbers<[1], [0], [0], [1], [0, 0, 1, 1], [], []>} : vector<8x128xbf16>, vector<128x128xbf16>, vector<8x128xf32> -> vector<8x128xf32>
    %106 = arith.addf %98, %105 : vector<8x128xf32>
    %c0_80 = arith.constant 0 : index
    %c0_81 = arith.constant 0 : index
    %107 = vector.load %arg6[%c0_80, %c0_81] : memref<8x128xf32, #tpu.memory_space<vmem>>, vector<8x128xf32>
    tpu.vector_store %arg6[%c0_80, %c0_81], %106 {strides = array<i32>} : memref<8x128xf32, #tpu.memory_space<vmem>>, vector<8x128xf32>,
    return
  }
  func.func @transform_0(%arg0: i32, %arg1: i32) -> (i32, i32) {
    %c0_i32 = arith.constant 0 : i32
    return %arg0, %arg1 : i32, i32
  }
  func.func @transform_1(%arg0: i32, %arg1: i32) -> (i32, i32) {
    %c0_i32 = arith.constant 0 : i32
    %c0_i32_0 = arith.constant 0 : i32
    %c0_i32_1 = arith.constant 0 : i32
    return %c0_i32, %c0_i32_0 : i32, i32
  }
  func.func @transform_2(%arg0: i32, %arg1: i32) -> (i32, i32, i32) {
    %c0_i32 = arith.constant 0 : i32
    %c0_i32_0 = arith.constant 0 : i32
    %c0_i32_1 = arith.constant 0 : i32
    %c0_i32_2 = arith.constant 0 : i32
    return %c0_i32, %c0_i32_0, %c0_i32_1 : i32, i32, i32
  }
  func.func @transform_3(%arg0: i32, %arg1: i32) -> (i32, i32) {
    %c0_i32 = arith.constant 0 : i32
    %c0_i32_0 = arith.constant 0 : i32
    %c0_i32_1 = arith.constant 0 : i32
    return %c0_i32, %c0_i32_0 : i32, i32
  }
  func.func @transform_4(%arg0: i32, %arg1: i32) -> (i32, i32) {
    %c0_i32 = arith.constant 0 : i32
    %c0_i32_0 = arith.constant 0 : i32
    return %arg0, %c0_i32 : i32, i32
  }
}

</mosaic_0001>

<llo_original>
// kernel: patch_linear_predictor.1
$region0: #{patch_linear_predictor.1}
  #allocation0 [shape = 'u32[]', space=smem, size = 0x4, offset = 0x4, fixed_abs, tag = 'smem constant byte address 0x4 - core index']
  #allocation1 [shape = 'u32[72,128]{1,0:T(1,128)}', space=vmem, size = 0x9000, scoped, tag = 'internal scratch']
  %s0 = inlined_call_operand.vmem [shape: f32[8,1024], index: 0, kind: input, shape index: {}]
  %s1 = inlined_call_operand.vmem [shape: bf16[128,128], index: 1, kind: input, shape index: {}]
  %s2 = inlined_call_operand.vmem [shape: bf16[8,128,128], index: 2, kind: input, shape index: {}]
  %s3 = inlined_call_operand.vmem [shape: f32[1,128], index: 3, kind: input, shape index: {}]
  %s4 = inlined_call_operand.vmem [shape: f32[8,128], index: 4, kind: output, shape index: {}]
  %s5 = sld [smem:[#allocation0]]
  $region30: #{patch_linear_predictor.1} parent=0
    _
  %s7 = ssub.s32 1, %s5
  %s8 = scalar_select 0, %s7, %s5
  // Predicated region
  $region2: #{patch_linear_predictor.1} parent=0 // pred_check
    _
  $region3: #{patch_linear_predictor.1} parent=0 // pred_check_branch
    %10 = sbr.rel (0) target = $region5
  $region4: #{patch_linear_predictor.1} parent=0 // pred_region
    _
  $region5: #{patch_linear_predictor.1} parent=0 // pred_fallthru
    _
  // Predicated region
  $region6: #{patch_linear_predictor.1} parent=0 // pred_check
    _
  $region7: #{patch_linear_predictor.1} parent=0 // pred_check_branch
    %12 = sbr.rel (0) target = $region9
  $region8: #{patch_linear_predictor.1} parent=0 // pred_region
    _
  $region9: #{patch_linear_predictor.1} parent=0 // pred_fallthru
    _
  // Predicated region
  $region10: #{patch_linear_predictor.1} parent=0 // pred_check
    _
  $region11: #{patch_linear_predictor.1} parent=0 // pred_check_branch
    %14 = sbr.rel (0) target = $region13
  $region12: #{patch_linear_predictor.1} parent=0 // pred_region
    _
  $region13: #{patch_linear_predictor.1} parent=0 // pred_fallthru
    _
  // Predicated region
  $region14: #{patch_linear_predictor.1} parent=0 // pred_check
    _
  $region15: #{patch_linear_predictor.1} parent=0 // pred_check_branch
    %16 = sbr.rel (0) target = $region17
  $region16: #{patch_linear_predictor.1} parent=0 // pred_region
    _
  $region17: #{patch_linear_predictor.1} parent=0 // pred_fallthru
    _
  %p17 = scmp.eq.s32.totalorder 0, 0
  // Predicated region
  $region18: #{patch_linear_predictor.1} parent=0 // pred_check
    %p18 = pneg %p17
  $region19: #{patch_linear_predictor.1} parent=0 // pred_check_branch
    %20 = sbr.rel (%p18) target = $region21
  $region20: #{patch_linear_predictor.1} parent=0 // pred_region
    %v21 = vld [vmem:[%s3] sm:$0x1]
    %v23 = vperm.slane %v21, 0
    %v25 = vadd.f32 %v23, 0.0
    %26 = vst [vmem:[%s4] sm:$0xff] %v25
  $region21: #{patch_linear_predictor.1} parent=0 // pred_fallthru
    _
  %v27 = vld [vmem:[%s1] sm:$0xf]
  %v28 = vld [vmem:[%s1 + $0x4] sm:$0xf]
  %v29 = vld [vmem:[%s1 + $0x8] sm:$0xf]
  %v30 = vld [vmem:[%s1 + $0xc] sm:$0xf]
  %v31 = vld [vmem:[%s1 + $0x10] sm:$0xf]
  %v32 = vld [vmem:[%s1 + $0x14] sm:$0xf]
  %v33 = vld [vmem:[%s1 + $0x18] sm:$0xf]
  %v34 = vld [vmem:[%s1 + $0x1c] sm:$0xf]
  %v35 = vld [vmem:[%s1 + $0x20] sm:$0xf]
  %v36 = vld [vmem:[%s1 + $0x24] sm:$0xf]
  %v37 = vld [vmem:[%s1 + $0x28] sm:$0xf]
  %v38 = vld [vmem:[%s1 + $0x2c] sm:$0xf]
  %v39 = vld [vmem:[%s1 + $0x30] sm:$0xf]
  %v40 = vld [vmem:[%s1 + $0x34] sm:$0xf]
  %v41 = vld [vmem:[%s1 + $0x38] sm:$0xf]
  %v42 = vld [vmem:[%s1 + $0x3c] sm:$0xf]
  %v43 = vld [vmem:[%s0] sm:$0xff]
  %v44 = vpack.c.bf16 %v43, %v43
  %v61 = vunpack.c.l.b16 %v27
  %v62 = vunpack.c.l.b16 %v28
  %v63 = vunpack.c.l.b16 %v29
  %v64 = vunpack.c.l.b16 %v30
  %v65 = vunpack.c.l.b16 %v31
  %v66 = vunpack.c.l.b16 %v32
  %v67 = vunpack.c.l.b16 %v33
  %v68 = vunpack.c.l.b16 %v34
  %v69 = vunpack.c.l.b16 %v35
  %v70 = vunpack.c.l.b16 %v36
  %v71 = vunpack.c.l.b16 %v37
  %v72 = vunpack.c.l.b16 %v38
  %v73 = vunpack.c.l.b16 %v39
  %v74 = vunpack.c.l.b16 %v40
  %v75 = vunpack.c.l.b16 %v41
  %v76 = vunpack.c.l.b16 %v42
  %v77 = vpack.c.b16 %v62, %v61
  %v78 = vpack.c.b16 %v64, %v63
  %v79 = vpack.c.b16 %v66, %v65
  %v80 = vpack.c.b16 %v68, %v67
  %v81 = vpack.c.b16 %v70, %v69
  %v82 = vpack.c.b16 %v72, %v71
  %v83 = vpack.c.b16 %v74, %v73
  %v84 = vpack.c.b16 %v76, %v75
  %93 = vmatpush.bf16.msra.mxu0 %v84
  %94 = vmatpush.bf16.msra.mxu0 %v83
  %95 = vmatpush.bf16.msra.mxu0 %v82
  %96 = vmatpush.bf16.msra.mxu0 %v81
  %97 = vmatpush.bf16.msra.mxu0 %v80
  %98 = vmatpush.bf16.msra.mxu0 %v79
  %99 = vmatpush.bf16.msra.mxu0 %v78
  %100 = vmatpush.bf16.msra.mxu0 %v77
  %101 = vmatmul.bf16.gmra.mxu0 %v44
  %v102 = vpop.f32.mrf.mxu0
  %v103 = vadd.f32 0.0, %v102
  %v104 = vpop.f32.mrf.mxu0
  %105 = vdwg.mxu0
  %v106 = vld [vmem:[%s4] sm:$0xff]
  %v107 = vpack.c.bf16 %v103, %v103
  %s108 = smul.u32 0, 8
  %s109 = smul.u32 %s108, 16
  %s110 = smul.addr %s109, 4
  %s111 = scalar_lea.vmem %s2, %s110
  %v112 = vld [vmem:[%s111] sm:$0xf]
  %v113 = vld [vmem:[%s111 + $0x4] sm:$0xf]
  %v114 = vld [vmem:[%s111 + $0x8] sm:$0xf]
  %v115 = vld [vmem:[%s111 + $0xc] sm:$0xf]
  %v116 = vld [vmem:[%s111 + $0x10] sm:$0xf]
  %v117 = vld [vmem:[%s111 + $0x14] sm:$0xf]
  %v118 = vld [vmem:[%s111 + $0x18] sm:$0xf]
  %v119 = vld [vmem:[%s111 + $0x1c] sm:$0xf]
  %v120 = vld [vmem:[%s111 + $0x20] sm:$0xf]
  %v121 = vld [vmem:[%s111 + $0x24] sm:$0xf]
  %v122 = vld [vmem:[%s111 + $0x28] sm:$0xf]
  %v123 = vld [vmem:[%s111 + $0x2c] sm:$0xf]
  %v124 = vld [vmem:[%s111 + $0x30] sm:$0xf]
  %v125 = vld [vmem:[%s111 + $0x34] sm:$0xf]
  %v126 = vld [vmem:[%s111 + $0x38] sm:$0xf]
  %v127 = vld [vmem:[%s111 + $0x3c] sm:$0xf]
  %v144 = vunpack.c.l.b16 %v112
  %v145 = vunpack.c.l.b16 %v113
  %v146 = vunpack.c.l.b16 %v114
  %v147 = vunpack.c.l.b16 %v115
  %v148 = vunpack.c.l.b16 %v116
  %v149 = vunpack.c.l.b16 %v117
  %v150 = vunpack.c.l.b16 %v118
  %v151 = vunpack.c.l.b16 %v119
  %v152 = vunpack.c.l.b16 %v120
  %v153 = vunpack.c.l.b16 %v121
  %v154 = vunpack.c.l.b16 %v122
  %v155 = vunpack.c.l.b16 %v123
  %v156 = vunpack.c.l.b16 %v124
  %v157 = vunpack.c.l.b16 %v125
  %v158 = vunpack.c.l.b16 %v126
  %v159 = vunpack.c.l.b16 %v127
  %v160 = vpack.c.b16 %v145, %v144
  %v161 = vpack.c.b16 %v147, %v146
  %v162 = vpack.c.b16 %v149, %v148
  %v163 = vpack.c.b16 %v151, %v150
  %v164 = vpack.c.b16 %v153, %v152
  %v165 = vpack.c.b16 %v155, %v154
  %v166 = vpack.c.b16 %v157, %v156
  %v167 = vpack.c.b16 %v159, %v158
  %176 = vmatpush.bf16.msra.mxu0 %v167
  %177 = vmatpush.bf16.msra.mxu0 %v166
  %178 = vmatpush.bf16.msra.mxu0 %v165
  %179 = vmatpush.bf16.msra.mxu0 %v164
  %180 = vmatpush.bf16.msra.mxu0 %v163
  %181 = vmatpush.bf16.msra.mxu0 %v162
  %182 = vmatpush.bf16.msra.mxu0 %v161
  %183 = vmatpush.bf16.msra.mxu0 %v160
  %184 = vmatmul.bf16.gmra.mxu0 %v107
  %v185 = vpop.f32.mrf.mxu0
  %v186 = vadd.f32 0.0, %v185
  %v187 = vpop.f32.mrf.mxu0
  %188 = vdwg.mxu0
  %v189 = vadd.f32 %v106, %v186
  %190 = vst [vmem:[%s4] sm:$0xff] %v189
  %v191 = vld [vmem:[%s0 + $0x8] sm:$0xff]
  %v192 = vpack.c.bf16 %v191, %v191
  %193 = vmatpush.bf16.msra.mxu0 %v84
  %194 = vmatpush.bf16.msra.mxu0 %v83
  %195 = vmatpush.bf16.msra.mxu0 %v82
  %196 = vmatpush.bf16.msra.mxu0 %v81
  %197 = vmatpush.bf16.msra.mxu0 %v80
  %198 = vmatpush.bf16.msra.mxu0 %v79
  %199 = vmatpush.bf16.msra.mxu0 %v78
  %200 = vmatpush.bf16.msra.mxu0 %v77
  %201 = vmatmul.bf16.gmra.mxu0 %v192
  %v202 = vpop.f32.mrf.mxu0
  %v203 = vadd.f32 0.0, %v202
  %v204 = vpop.f32.mrf.mxu0
  %205 = vdwg.mxu0
  %v206 = vld [vmem:[%s4] sm:$0xff]
  %v207 = vpack.c.bf16 %v203, %v203
  %s208 = sadd.s32 %s108, 1
  %s209 = smul.u32 %s208, 16
  %s210 = smul.addr %s209, 4
  %s211 = scalar_lea.vmem %s2, %s210
  %v212 = vld [vmem:[%s211] sm:$0xf]
  %v213 = vld [vmem:[%s211 + $0x4] sm:$0xf]
  %v214 = vld [vmem:[%s211 + $0x8] sm:$0xf]
  %v215 = vld [vmem:[%s211 + $0xc] sm:$0xf]
  %v216 = vld [vmem:[%s211 + $0x10] sm:$0xf]
  %v217 = vld [vmem:[%s211 + $0x14] sm:$0xf]
  %v218 = vld [vmem:[%s211 + $0x18] sm:$0xf]
  %v219 = vld [vmem:[%s211 + $0x1c] sm:$0xf]
  %v220 = vld [vmem:[%s211 + $0x20] sm:$0xf]
  %v221 = vld [vmem:[%s211 + $0x24] sm:$0xf]
  %v222 = vld [vmem:[%s211 + $0x28] sm:$0xf]
  %v223 = vld [vmem:[%s211 + $0x2c] sm:$0xf]
  %v224 = vld [vmem:[%s211 + $0x30] sm:$0xf]
  %v225 = vld [vmem:[%s211 + $0x34] sm:$0xf]
  %v226 = vld [vmem:[%s211 + $0x38] sm:$0xf]
  %v227 = vld [vmem:[%s211 + $0x3c] sm:$0xf]
  %v244 = vunpack.c.l.b16 %v212
  %v245 = vunpack.c.l.b16 %v213
  %v246 = vunpack.c.l.b16 %v214
  %v247 = vunpack.c.l.b16 %v215
  %v248 = vunpack.c.l.b16 %v216
  %v249 = vunpack.c.l.b16 %v217
  %v250 = vunpack.c.l.b16 %v218
  %v251 = vunpack.c.l.b16 %v219
  %v252 = vunpack.c.l.b16 %v220
  %v253 = vunpack.c.l.b16 %v221
  %v254 = vunpack.c.l.b16 %v222
  %v255 = vunpack.c.l.b16 %v223
  %v256 = vunpack.c.l.b16 %v224
  %v257 = vunpack.c.l.b16 %v225
  %v258 = vunpack.c.l.b16 %v226
  %v259 = vunpack.c.l.b16 %v227
  %v260 = vpack.c.b16 %v245, %v244
  %v261 = vpack.c.b16 %v247, %v246
  %v262 = vpack.c.b16 %v249, %v248
  %v263 = vpack.c.b16 %v251, %v250
  %v264 = vpack.c.b16 %v253, %v252
  %v265 = vpack.c.b16 %v255, %v254
  %v266 = vpack.c.b16 %v257, %v256
  %v267 = vpack.c.b16 %v259, %v258
  %276 = vmatpush.bf16.msra.mxu0 %v267
  %277 = vmatpush.bf16.msra.mxu0 %v266
  %278 = vmatpush.bf16.msra.mxu0 %v265
  %279 = vmatpush.bf16.msra.mxu0 %v264
  %280 = vmatpush.bf16.msra.mxu0 %v263
  %281 = vmatpush.bf16.msra.mxu0 %v262
  %282 = vmatpush.bf16.msra.mxu0 %v261
  %283 = vmatpush.bf16.msra.mxu0 %v260
  %284 = vmatmul.bf16.gmra.mxu0 %v207
  %v285 = vpop.f32.mrf.mxu0
  %v286 = vadd.f32 0.0, %v285
  %v287 = vpop.f32.mrf.mxu0
  %288 = vdwg.mxu0
  %v289 = vadd.f32 %v206, %v286
  %290 = vst [vmem:[%s4] sm:$0xff] %v289
  %v291 = vld [vmem:[%s0 + $0x10] sm:$0xff]
  %v292 = vpack.c.bf16 %v291, %v291
  %293 = vmatpush.bf16.msra.mxu0 %v84
  %294 = vmatpush.bf16.msra.mxu0 %v83
  %295 = vmatpush.bf16.msra.mxu0 %v82
  %296 = vmatpush.bf16.msra.mxu0 %v81
  %297 = vmatpush.bf16.msra.mxu0 %v80
  %298 = vmatpush.bf16.msra.mxu0 %v79
  %299 = vmatpush.bf16.msra.mxu0 %v78
  %300 = vmatpush.bf16.msra.mxu0 %v77
  %301 = vmatmul.bf16.gmra.mxu0 %v292
  %v302 = vpop.f32.mrf.mxu0
  %v303 = vadd.f32 0.0, %v302
  %v304 = vpop.f32.mrf.mxu0
  %305 = vdwg.mxu0
  %v306 = vld [vmem:[%s4] sm:$0xff]
  %v307 = vpack.c.bf16 %v303, %v303
  %s308 = sadd.s32 %s108, 2
  %s309 = smul.u32 %s308, 16
  %s310 = smul.addr %s309, 4
  %s311 = scalar_lea.vmem %s2, %s310
  %v312 = vld [vmem:[%s311] sm:$0xf]
  %v313 = vld [vmem:[%s311 + $0x4] sm:$0xf]
  %v314 = vld [vmem:[%s311 + $0x8] sm:$0xf]
  %v315 = vld [vmem:[%s311 + $0xc] sm:$0xf]
  %v316 = vld [vmem:[%s311 + $0x10] sm:$0xf]
  %v317 = vld [vmem:[%s311 + $0x14] sm:$0xf]
  %v318 = vld [vmem:[%s311 + $0x18] sm:$0xf]
  %v319 = vld [vmem:[%s311 + $0x1c] sm:$0xf]
  %v320 = vld [vmem:[%s311 + $0x20] sm:$0xf]
  %v321 = vld [vmem:[%s311 + $0x24] sm:$0xf]
  %v322 = vld [vmem:[%s311 + $0x28] sm:$0xf]
  %v323 = vld [vmem:[%s311 + $0x2c] sm:$0xf]
  %v324 = vld [vmem:[%s311 + $0x30] sm:$0xf]
  %v325 = vld [vmem:[%s311 + $0x34] sm:$0xf]
  %v326 = vld [vmem:[%s311 + $0x38] sm:$0xf]
  %v327 = vld [vmem:[%s311 + $0x3c] sm:$0xf]
  %v344 = vunpack.c.l.b16 %v312
  %v345 = vunpack.c.l.b16 %v313
  %v346 = vunpack.c.l.b16 %v314
  %v347 = vunpack.c.l.b16 %v315
  %v348 = vunpack.c.l.b16 %v316
  %v349 = vunpack.c.l.b16 %v317
  %v350 = vunpack.c.l.b16 %v318
  %v351 = vunpack.c.l.b16 %v319
  %v352 = vunpack.c.l.b16 %v320
  %v353 = vunpack.c.l.b16 %v321
  %v354 = vunpack.c.l.b16 %v322
  %v355 = vunpack.c.l.b16 %v323
  %v356 = vunpack.c.l.b16 %v324
  %v357 = vunpack.c.l.b16 %v325
  %v358 = vunpack.c.l.b16 %v326
  %v359 = vunpack.c.l.b16 %v327
  %v360 = vpack.c.b16 %v345, %v344
  %v361 = vpack.c.b16 %v347, %v346
  %v362 = vpack.c.b16 %v349, %v348
  %v363 = vpack.c.b16 %v351, %v350
  %v364 = vpack.c.b16 %v353, %v352
  %v365 = vpack.c.b16 %v355, %v354
  %v366 = vpack.c.b16 %v357, %v356
  %v367 = vpack.c.b16 %v359, %v358
  %376 = vmatpush.bf16.msra.mxu0 %v367
  %377 = vmatpush.bf16.msra.mxu0 %v366
  %378 = vmatpush.bf16.msra.mxu0 %v365
  %379 = vmatpush.bf16.msra.mxu0 %v364
  %380 = vmatpush.bf16.msra.mxu0 %v363
  %381 = vmatpush.bf16.msra.mxu0 %v362
  %382 = vmatpush.bf16.msra.mxu0 %v361
  %383 = vmatpush.bf16.msra.mxu0 %v360
  %384 = vmatmul.bf16.gmra.mxu0 %v307
  %v385 = vpop.f32.mrf.mxu0
  %v386 = vadd.f32 0.0, %v385
  %v387 = vpop.f32.mrf.mxu0
  %388 = vdwg.mxu0
  %v389 = vadd.f32 %v306, %v386
  %390 = vst [vmem:[%s4] sm:$0xff] %v389
  %v391 = vld [vmem:[%s0 + $0x18] sm:$0xff]
  %v392 = vpack.c.bf16 %v391, %v391
  %393 = vmatpush.bf16.msra.mxu0 %v84
  %394 = vmatpush.bf16.msra.mxu0 %v83
  %395 = vmatpush.bf16.msra.mxu0 %v82
  %396 = vmatpush.bf16.msra.mxu0 %v81
  %397 = vmatpush.bf16.msra.mxu0 %v80
  %398 = vmatpush.bf16.msra.mxu0 %v79
  %399 = vmatpush.bf16.msra.mxu0 %v78
  %400 = vmatpush.bf16.msra.mxu0 %v77
  %401 = vmatmul.bf16.gmra.mxu0 %v392
  %v402 = vpop.f32.mrf.mxu0
  %v403 = vadd.f32 0.0, %v402
  %v404 = vpop.f32.mrf.mxu0
  %405 = vdwg.mxu0
  %v406 = vld [vmem:[%s4] sm:$0xff]
  %v407 = vpack.c.bf16 %v403, %v403
  %s408 = sadd.s32 %s108, 3
  %s409 = smul.u32 %s408, 16
  %s410 = smul.addr %s409, 4
  %s411 = scalar_lea.vmem %s2, %s410
  %v412 = vld [vmem:[%s411] sm:$0xf]
  %v413 = vld [vmem:[%s411 + $0x4] sm:$0xf]
  %v414 = vld [vmem:[%s411 + $0x8] sm:$0xf]
  %v415 = vld [vmem:[%s411 + $0xc] sm:$0xf]
  %v416 = vld [vmem:[%s411 + $0x10] sm:$0xf]
  %v417 = vld [vmem:[%s411 + $0x14] sm:$0xf]
  %v418 = vld [vmem:[%s411 + $0x18] sm:$0xf]
  %v419 = vld [vmem:[%s411 + $0x1c] sm:$0xf]
  %v420 = vld [vmem:[%s411 + $0x20] sm:$0xf]
  %v421 = vld [vmem:[%s411 + $0x24] sm:$0xf]
  %v422 = vld [vmem:[%s411 + $0x28] sm:$0xf]
  %v423 = vld [vmem:[%s411 + $0x2c] sm:$0xf]
  %v424 = vld [vmem:[%s411 + $0x30] sm:$0xf]
  %v425 = vld [vmem:[%s411 + $0x34] sm:$0xf]
  %v426 = vld [vmem:[%s411 + $0x38] sm:$0xf]
  %v427 = vld [vmem:[%s411 + $0x3c] sm:$0xf]
  %v444 = vunpack.c.l.b16 %v412
  %v445 = vunpack.c.l.b16 %v413
  %v446 = vunpack.c.l.b16 %v414
  %v447 = vunpack.c.l.b16 %v415
  %v448 = vunpack.c.l.b16 %v416
  %v449 = vunpack.c.l.b16 %v417
  %v450 = vunpack.c.l.b16 %v418
  %v451 = vunpack.c.l.b16 %v419
  %v452 = vunpack.c.l.b16 %v420
  %v453 = vunpack.c.l.b16 %v421
  %v454 = vunpack.c.l.b16 %v422
  %v455 = vunpack.c.l.b16 %v423
  %v456 = vunpack.c.l.b16 %v424
  %v457 = vunpack.c.l.b16 %v425
  %v458 = vunpack.c.l.b16 %v426
  %v459 = vunpack.c.l.b16 %v427
  %v460 = vpack.c.b16 %v445, %v444
  %v461 = vpack.c.b16 %v447, %v446
  %v462 = vpack.c.b16 %v449, %v448
  %v463 = vpack.c.b16 %v451, %v450
  %v464 = vpack.c.b16 %v453, %v452
  %v465 = vpack.c.b16 %v455, %v454
  %v466 = vpack.c.b16 %v457, %v456
  %v467 = vpack.c.b16 %v459, %v458
  %476 = vmatpush.bf16.msra.mxu0 %v467
  %477 = vmatpush.bf16.msra.mxu0 %v466
  %478 = vmatpush.bf16.msra.mxu0 %v465
  %479 = vmatpush.bf16.msra.mxu0 %v464
  %480 = vmatpush.bf16.msra.mxu0 %v463
  %481 = vmatpush.bf16.msra.mxu0 %v462
  %482 = vmatpush.bf16.msra.mxu0 %v461
  %483 = vmatpush.bf16.msra.mxu0 %v460
  %484 = vmatmul.bf16.gmra.mxu0 %v407
  %v485 = vpop.f32.mrf.mxu0
  %v486 = vadd.f32 0.0, %v485
  %v487 = vpop.f32.mrf.mxu0
  %488 = vdwg.mxu0
  %v489 = vadd.f32 %v406, %v486
  %490 = vst [vmem:[%s4] sm:$0xff] %v489
  %v491 = vld [vmem:[%s0 + $0x20] sm:$0xff]
  %v492 = vpack.c.bf16 %v491, %v491
  %493 = vmatpush.bf16.msra.mxu0 %v84
  %494 = vmatpush.bf16.msra.mxu0 %v83
  %495 = vmatpush.bf16.msra.mxu0 %v82
  %496 = vmatpush.bf16.msra.mxu0 %v81
  %497 = vmatpush.bf16.msra.mxu0 %v80
  %498 = vmatpush.bf16.msra.mxu0 %v79
  %499 = vmatpush.bf16.msra.mxu0 %v78
  %500 = vmatpush.bf16.msra.mxu0 %v77
  %501 = vmatmul.bf16.gmra.mxu0 %v492
  %v502 = vpop.f32.mrf.mxu0
  %v503 = vadd.f32 0.0, %v502
  %v504 = vpop.f32.mrf.mxu0
  %505 = vdwg.mxu0
  %v506 = vld [vmem:[%s4] sm:$0xff]
  %v507 = vpack.c.bf16 %v503, %v503
  %s508 = sadd.s32 %s108, 4
  %s509 = smul.u32 %s508, 16
  %s510 = smul.addr %s509, 4
  %s511 = scalar_lea.vmem %s2, %s510
  %v512 = vld [vmem:[%s511] sm:$0xf]
  %v513 = vld [vmem:[%s511 + $0x4] sm:$0xf]
  %v514 = vld [vmem:[%s511 + $0x8] sm:$0xf]
  %v515 = vld [vmem:[%s511 + $0xc] sm:$0xf]
  %v516 = vld [vmem:[%s511 + $0x10] sm:$0xf]
  %v517 = vld [vmem:[%s511 + $0x14] sm:$0xf]
  %v518 = vld [vmem:[%s511 + $0x18] sm:$0xf]
  %v519 = vld [vmem:[%s511 + $0x1c] sm:$0xf]
  %v520 = vld [vmem:[%s511 + $0x20] sm:$0xf]
  %v521 = vld [vmem:[%s511 + $0x24] sm:$0xf]
  %v522 = vld [vmem:[%s511 + $0x28] sm:$0xf]
  %v523 = vld [vmem:[%s511 + $0x2c] sm:$0xf]
  %v524 = vld [vmem:[%s511 + $0x30] sm:$0xf]
  %v525 = vld [vmem:[%s511 + $0x34] sm:$0xf]
  %v526 = vld [vmem:[%s511 + $0x38] sm:$0xf]
  %v527 = vld [vmem:[%s511 + $0x3c] sm:$0xf]
  %v544 = vunpack.c.l.b16 %v512
  %v545 = vunpack.c.l.b16 %v513
  %v546 = vunpack.c.l.b16 %v514
  %v547 = vunpack.c.l.b16 %v515
  %v548 = vunpack.c.l.b16 %v516
  %v549 = vunpack.c.l.b16 %v517
  %v550 = vunpack.c.l.b16 %v518
  %v551 = vunpack.c.l.b16 %v519
  %v552 = vunpack.c.l.b16 %v520
  %v553 = vunpack.c.l.b16 %v521
  %v554 = vunpack.c.l.b16 %v522
  %v555 = vunpack.c.l.b16 %v523
  %v556 = vunpack.c.l.b16 %v524
  %v557 = vunpack.c.l.b16 %v525
  %v558 = vunpack.c.l.b16 %v526
  %v559 = vunpack.c.l.b16 %v527
  %v560 = vpack.c.b16 %v545, %v544
  %v561 = vpack.c.b16 %v547, %v546
  %v562 = vpack.c.b16 %v549, %v548
  %v563 = vpack.c.b16 %v551, %v550
  %v564 = vpack.c.b16 %v553, %v552
  %v565 = vpack.c.b16 %v555, %v554
  %v566 = vpack.c.b16 %v557, %v556
  %v567 = vpack.c.b16 %v559, %v558
  %576 = vmatpush.bf16.msra.mxu0 %v567
  %577 = vmatpush.bf16.msra.mxu0 %v566
  %578 = vmatpush.bf16.msra.mxu0 %v565
  %579 = vmatpush.bf16.msra.mxu0 %v564
  %580 = vmatpush.bf16.msra.mxu0 %v563
  %581 = vmatpush.bf16.msra.mxu0 %v562
  %582 = vmatpush.bf16.msra.mxu0 %v561
  %583 = vmatpush.bf16.msra.mxu0 %v560
  %584 = vmatmul.bf16.gmra.mxu0 %v507
  %v585 = vpop.f32.mrf.mxu0
  %v586 = vadd.f32 0.0, %v585
  %v587 = vpop.f32.mrf.mxu0
  %588 = vdwg.mxu0
  %v589 = vadd.f32 %v506, %v586
  %590 = vst [vmem:[%s4] sm:$0xff] %v589
  %v591 = vld [vmem:[%s0 + $0x28] sm:$0xff]
  %v592 = vpack.c.bf16 %v591, %v591
  %593 = vmatpush.bf16.msra.mxu0 %v84
  %594 = vmatpush.bf16.msra.mxu0 %v83
  %595 = vmatpush.bf16.msra.mxu0 %v82
  %596 = vmatpush.bf16.msra.mxu0 %v81
  %597 = vmatpush.bf16.msra.mxu0 %v80
  %598 = vmatpush.bf16.msra.mxu0 %v79
  %599 = vmatpush.bf16.msra.mxu0 %v78
  %600 = vmatpush.bf16.msra.mxu0 %v77
  %601 = vmatmul.bf16.gmra.mxu0 %v592
  %v602 = vpop.f32.mrf.mxu0
  %v603 = vadd.f32 0.0, %v602
  %v604 = vpop.f32.mrf.mxu0
  %605 = vdwg.mxu0
  %v606 = vld [vmem:[%s4] sm:$0xff]
  %v607 = vpack.c.bf16 %v603, %v603
  %s608 = sadd.s32 %s108, 5
  %s609 = smul.u32 %s608, 16
  %s610 = smul.addr %s609, 4
  %s611 = scalar_lea.vmem %s2, %s610
  %v612 = vld [vmem:[%s611] sm:$0xf]
  %v613 = vld [vmem:[%s611 + $0x4] sm:$0xf]
  %v614 = vld [vmem:[%s611 + $0x8] sm:$0xf]
  %v615 = vld [vmem:[%s611 + $0xc] sm:$0xf]
  %v616 = vld [vmem:[%s611 + $0x10] sm:$0xf]
  %v617 = vld [vmem:[%s611 + $0x14] sm:$0xf]
  %v618 = vld [vmem:[%s611 + $0x18] sm:$0xf]
  %v619 = vld [vmem:[%s611 + $0x1c] sm:$0xf]
  %v620 = vld [vmem:[%s611 + $0x20] sm:$0xf]
  %v621 = vld [vmem:[%s611 + $0x24] sm:$0xf]
  %v622 = vld [vmem:[%s611 + $0x28] sm:$0xf]
  %v623 = vld [vmem:[%s611 + $0x2c] sm:$0xf]
  %v624 = vld [vmem:[%s611 + $0x30] sm:$0xf]
  %v625 = vld [vmem:[%s611 + $0x34] sm:$0xf]
  %v626 = vld [vmem:[%s611 + $0x38] sm:$0xf]
  %v627 = vld [vmem:[%s611 + $0x3c] sm:$0xf]
  %v644 = vunpack.c.l.b16 %v612
  %v645 = vunpack.c.l.b16 %v613
  %v646 = vunpack.c.l.b16 %v614
  %v647 = vunpack.c.l.b16 %v615
  %v648 = vunpack.c.l.b16 %v616
  %v649 = vunpack.c.l.b16 %v617
  %v650 = vunpack.c.l.b16 %v618
  %v651 = vunpack.c.l.b16 %v619
  %v652 = vunpack.c.l.b16 %v620
  %v653 = vunpack.c.l.b16 %v621
  %v654 = vunpack.c.l.b16 %v622
  %v655 = vunpack.c.l.b16 %v623
  %v656 = vunpack.c.l.b16 %v624
  %v657 = vunpack.c.l.b16 %v625
  %v658 = vunpack.c.l.b16 %v626
  %v659 = vunpack.c.l.b16 %v627
  %v660 = vpack.c.b16 %v645, %v644
  %v661 = vpack.c.b16 %v647, %v646
  %v662 = vpack.c.b16 %v649, %v648
  %v663 = vpack.c.b16 %v651, %v650
  %v664 = vpack.c.b16 %v653, %v652
  %v665 = vpack.c.b16 %v655, %v654
  %v666 = vpack.c.b16 %v657, %v656
  %v667 = vpack.c.b16 %v659, %v658
  %676 = vmatpush.bf16.msra.mxu0 %v667
  %677 = vmatpush.bf16.msra.mxu0 %v666
  %678 = vmatpush.bf16.msra.mxu0 %v665
  %679 = vmatpush.bf16.msra.mxu0 %v664
  %680 = vmatpush.bf16.msra.mxu0 %v663
  %681 = vmatpush.bf16.msra.mxu0 %v662
  %682 = vmatpush.bf16.msra.mxu0 %v661
  %683 = vmatpush.bf16.msra.mxu0 %v660
  %684 = vmatmul.bf16.gmra.mxu0 %v607
  %v685 = vpop.f32.mrf.mxu0
  %v686 = vadd.f32 0.0, %v685
  %v687 = vpop.f32.mrf.mxu0
  %688 = vdwg.mxu0
  %v689 = vadd.f32 %v606, %v686
  %690 = vst [vmem:[%s4] sm:$0xff] %v689
  %v691 = vld [vmem:[%s0 + $0x30] sm:$0xff]
  %v692 = vpack.c.bf16 %v691, %v691
  %693 = vmatpush.bf16.msra.mxu0 %v84
  %694 = vmatpush.bf16.msra.mxu0 %v83
  %695 = vmatpush.bf16.msra.mxu0 %v82
  %696 = vmatpush.bf16.msra.mxu0 %v81
  %697 = vmatpush.bf16.msra.mxu0 %v80
  %698 = vmatpush.bf16.msra.mxu0 %v79
  %699 = vmatpush.bf16.msra.mxu0 %v78
  %700 = vmatpush.bf16.msra.mxu0 %v77
  %701 = vmatmul.bf16.gmra.mxu0 %v692
  %v702 = vpop.f32.mrf.mxu0
  %v703 = vadd.f32 0.0, %v702
  %v704 = vpop.f32.mrf.mxu0
  %705 = vdwg.mxu0
  %v706 = vld [vmem:[%s4] sm:$0xff]
  %v707 = vpack.c.bf16 %v703, %v703
  %s708 = sadd.s32 %s108, 6
  %s709 = smul.u32 %s708, 16
  %s710 = smul.addr %s709, 4
  %s711 = scalar_lea.vmem %s2, %s710
  %v712 = vld [vmem:[%s711] sm:$0xf]
  %v713 = vld [vmem:[%s711 + $0x4] sm:$0xf]
  %v714 = vld [vmem:[%s711 + $0x8] sm:$0xf]
  %v715 = vld [vmem:[%s711 + $0xc] sm:$0xf]
  %v716 = vld [vmem:[%s711 + $0x10] sm:$0xf]
  %v717 = vld [vmem:[%s711 + $0x14] sm:$0xf]
  %v718 = vld [vmem:[%s711 + $0x18] sm:$0xf]
  %v719 = vld [vmem:[%s711 + $0x1c] sm:$0xf]
  %v720 = vld [vmem:[%s711 + $0x20] sm:$0xf]
  %v721 = vld [vmem:[%s711 + $0x24] sm:$0xf]
  %v722 = vld [vmem:[%s711 + $0x28] sm:$0xf]
  %v723 = vld [vmem:[%s711 + $0x2c] sm:$0xf]
  %v724 = vld [vmem:[%s711 + $0x30] sm:$0xf]
  %v725 = vld [vmem:[%s711 + $0x34] sm:$0xf]
  %v726 = vld [vmem:[%s711 + $0x38] sm:$0xf]
  %v727 = vld [vmem:[%s711 + $0x3c] sm:$0xf]
  %v744 = vunpack.c.l.b16 %v712
  %v745 = vunpack.c.l.b16 %v713
  %v746 = vunpack.c.l.b16 %v714
  %v747 = vunpack.c.l.b16 %v715
  %v748 = vunpack.c.l.b16 %v716
  %v749 = vunpack.c.l.b16 %v717
  %v750 = vunpack.c.l.b16 %v718
  %v751 = vunpack.c.l.b16 %v719
  %v752 = vunpack.c.l.b16 %v720
  %v753 = vunpack.c.l.b16 %v721
  %v754 = vunpack.c.l.b16 %v722
  %v755 = vunpack.c.l.b16 %v723
  %v756 = vunpack.c.l.b16 %v724
  %v757 = vunpack.c.l.b16 %v725
  %v758 = vunpack.c.l.b16 %v726
  %v759 = vunpack.c.l.b16 %v727
  %v760 = vpack.c.b16 %v745, %v744
  %v761 = vpack.c.b16 %v747, %v746
  %v762 = vpack.c.b16 %v749, %v748
  %v763 = vpack.c.b16 %v751, %v750
  %v764 = vpack.c.b16 %v753, %v752
  %v765 = vpack.c.b16 %v755, %v754
  %v766 = vpack.c.b16 %v757, %v756
  %v767 = vpack.c.b16 %v759, %v758
  %776 = vmatpush.bf16.msra.mxu0 %v767
  %777 = vmatpush.bf16.msra.mxu0 %v766
  %778 = vmatpush.bf16.msra.mxu0 %v765
  %779 = vmatpush.bf16.msra.mxu0 %v764
  %780 = vmatpush.bf16.msra.mxu0 %v763
  %781 = vmatpush.bf16.msra.mxu0 %v762
  %782 = vmatpush.bf16.msra.mxu0 %v761
  %783 = vmatpush.bf16.msra.mxu0 %v760
  %784 = vmatmul.bf16.gmra.mxu0 %v707
  %v785 = vpop.f32.mrf.mxu0
  %v786 = vadd.f32 0.0, %v785
  %v787 = vpop.f32.mrf.mxu0
  %788 = vdwg.mxu0
  %v789 = vadd.f32 %v706, %v786
  %790 = vst [vmem:[%s4] sm:$0xff] %v789
  %v791 = vld [vmem:[%s0 + $0x38] sm:$0xff]
  %v792 = vpack.c.bf16 %v791, %v791
  %793 = vmatpush.bf16.msra.mxu0 %v84
  %794 = vmatpush.bf16.msra.mxu0 %v83
  %795 = vmatpush.bf16.msra.mxu0 %v82
  %796 = vmatpush.bf16.msra.mxu0 %v81
  %797 = vmatpush.bf16.msra.mxu0 %v80
  %798 = vmatpush.bf16.msra.mxu0 %v79
  %799 = vmatpush.bf16.msra.mxu0 %v78
  %800 = vmatpush.bf16.msra.mxu0 %v77
  %801 = vmatmul.bf16.gmra.mxu0 %v792
  %v802 = vpop.f32.mrf.mxu0
  %v803 = vadd.f32 0.0, %v802
  %v804 = vpop.f32.mrf.mxu0
  %805 = vdwg.mxu0
  %v806 = vld [vmem:[%s4] sm:$0xff]
  %v807 = vpack.c.bf16 %v803, %v803
  %s808 = sadd.s32 %s108, 7
  %s809 = smul.u32 %s808, 16
  %s810 = smul.addr %s809, 4
  %s811 = scalar_lea.vmem %s2, %s810
  %v812 = vld [vmem:[%s811] sm:$0xf]
  %v813 = vld [vmem:[%s811 + $0x4] sm:$0xf]
  %v814 = vld [vmem:[%s811 + $0x8] sm:$0xf]
  %v815 = vld [vmem:[%s811 + $0xc] sm:$0xf]
  %v816 = vld [vmem:[%s811 + $0x10] sm:$0xf]
  %v817 = vld [vmem:[%s811 + $0x14] sm:$0xf]
  %v818 = vld [vmem:[%s811 + $0x18] sm:$0xf]
  %v819 = vld [vmem:[%s811 + $0x1c] sm:$0xf]
  %v820 = vld [vmem:[%s811 + $0x20] sm:$0xf]
  %v821 = vld [vmem:[%s811 + $0x24] sm:$0xf]
  %v822 = vld [vmem:[%s811 + $0x28] sm:$0xf]
  %v823 = vld [vmem:[%s811 + $0x2c] sm:$0xf]
  %v824 = vld [vmem:[%s811 + $0x30] sm:$0xf]
  %v825 = vld [vmem:[%s811 + $0x34] sm:$0xf]
  %v826 = vld [vmem:[%s811 + $0x38] sm:$0xf]
  %v827 = vld [vmem:[%s811 + $0x3c] sm:$0xf]
  %v844 = vunpack.c.l.b16 %v812
  %v845 = vunpack.c.l.b16 %v813
  %v846 = vunpack.c.l.b16 %v814
  %v847 = vunpack.c.l.b16 %v815
  %v848 = vunpack.c.l.b16 %v816
  %v849 = vunpack.c.l.b16 %v817
  %v850 = vunpack.c.l.b16 %v818
  %v851 = vunpack.c.l.b16 %v819
  %v852 = vunpack.c.l.b16 %v820
  %v853 = vunpack.c.l.b16 %v821
  %v854 = vunpack.c.l.b16 %v822
  %v855 = vunpack.c.l.b16 %v823
  %v856 = vunpack.c.l.b16 %v824
  %v857 = vunpack.c.l.b16 %v825
  %v858 = vunpack.c.l.b16 %v826
  %v859 = vunpack.c.l.b16 %v827
  %v860 = vpack.c.b16 %v845, %v844
  %v861 = vpack.c.b16 %v847, %v846
  %v862 = vpack.c.b16 %v849, %v848
  %v863 = vpack.c.b16 %v851, %v850
  %v864 = vpack.c.b16 %v853, %v852
  %v865 = vpack.c.b16 %v855, %v854
  %v866 = vpack.c.b16 %v857, %v856
  %v867 = vpack.c.b16 %v859, %v858
  %876 = vmatpush.bf16.msra.mxu0 %v867
  %877 = vmatpush.bf16.msra.mxu0 %v866
  %878 = vmatpush.bf16.msra.mxu0 %v865
  %879 = vmatpush.bf16.msra.mxu0 %v864
  %880 = vmatpush.bf16.msra.mxu0 %v863
  %881 = vmatpush.bf16.msra.mxu0 %v862
  %882 = vmatpush.bf16.msra.mxu0 %v861
  %883 = vmatpush.bf16.msra.mxu0 %v860
  %884 = vmatmul.bf16.gmra.mxu0 %v807
  %v885 = vpop.f32.mrf.mxu0
  %v886 = vadd.f32 0.0, %v885
  %v887 = vpop.f32.mrf.mxu0
  %888 = vdwg.mxu0
  %v889 = vadd.f32 %v806, %v886
  %890 = vst [vmem:[%s4] sm:$0xff] %v889
  // Predicated region
  $region22: #{patch_linear_predictor.1} parent=0 // pred_check
    _
  $region23: #{patch_linear_predictor.1} parent=0 // pred_check_branch
    %892 = sbr.rel (0) target = $region25
  $region24: #{patch_linear_predictor.1} parent=0 // pred_region
    _
  $region25: #{patch_linear_predictor.1} parent=0 // pred_fallthru
    _
  // Predicated region
  $region26: #{patch_linear_predictor.1} parent=0 // pred_check
    _
  $region27: #{patch_linear_predictor.1} parent=0 // pred_check_branch
    %894 = sbr.rel (0) target = $region29
  $region28: #{patch_linear_predictor.1} parent=0 // pred_region
    _
  $region29: #{patch_linear_predictor.1} parent=0 // pred_fallthru
    _

</llo_original>
